<compile_context>
chip_gen: v5e
topology: v5e:2x2
jax: 0.10.0
libtpu: 0.0.40
codegen_flags: <defaults>
</compile_context>

<pallas_src>
import functools

import jax
import jax.numpy as jnp
from jax.experimental import pallas as pl
from jax.experimental.pallas import tpu as pltpu

# Set to jax.lax.Precision.HIGHEST if bit-level parity with fp32 PyTorch matmuls matters.
MATMUL_PRECISION = None


def _round_up(x, m):
    return (x + m - 1) // m * m


# ----------------------------------------------------------------------------
# Tiled linear kernel: (M, K) @ (K, N) + b -> (M, N)
# Used for both the hoisted input projection (gi) and the vocab projection.
# ----------------------------------------------------------------------------
def linear_kernel(x_ref, w_ref, b_ref, o_ref):
    acc = jnp.dot(x_ref[...], w_ref[...],
                  precision=MATMUL_PRECISION,
                  preferred_element_type=jnp.float32)
    o_ref[...] = (acc + b_ref[...]).astype(o_ref.dtype)


def linear_pallas(x, w_t, b, *, tm=256, tn=512):
    M, K = x.shape
    N = w_t.shape[-1]
    tm = min(tm, M)   # full-dim block when small (always legal); multiple of 8 otherwise
    tn = min(tn, N)   # full-dim block when small; multiple of 128 otherwise
    grid = (pl.cdiv(M, tm), pl.cdiv(N, tn))
    cost = pl.CostEstimate(flops=2 * M * K * N, transcendentals=0,
                           bytes_accessed=4 * (M * K + K * N + M * N))
    return pl.pallas_call(
        linear_kernel,
        out_shape=jax.ShapeDtypeStruct((M, N), jnp.float32),
        grid_spec=pltpu.PrefetchScalarGridSpec(
            num_scalar_prefetch=0,
            grid=grid,
            in_specs=[
                pl.BlockSpec((tm, K), lambda i, j: (i, 0)),   # activations tile
                pl.BlockSpec((K, tn), lambda i, j: (0, j)),   # weight tile (streams over N)
                pl.BlockSpec((1, tn), lambda i, j: (0, j)),   # bias tile
            ],
            out_specs=pl.BlockSpec((tm, tn), lambda i, j: (i, j)),
        ),
        compiler_params=pltpu.CompilerParams(
            # Both axes independent -> megacore-shardable on v7x; harmless on v5e/v6e.
            dimension_semantics=("parallel", "parallel"),
        ),
        cost_estimate=cost,
    )(x, w_t, b)


# ----------------------------------------------------------------------------
# GRU recurrence kernel: one grid step per CHUNK of time steps.
#   gi (precomputed x @ W_ih^T + b_ih) is streamed chunk-by-chunk; only the serial
#   gh = h @ W_hh matmul remains inside the recurrence.
# ----------------------------------------------------------------------------
def gru_chunk_kernel(gi_ref, whh_ref, bhh_ref, h0_ref, hids_ref, h_scr,
                     *, hidden_size, chunk):
    c = pl.program_id(0)

    @pl.when(c == 0)
    def _():
        h_scr[...] = h0_ref[...].astype(jnp.float32)

    H = hidden_size
    whh = whh_ref[...]          # (H, 3H) resident across the chunk (loaded once)
    bhh = bhh_ref[...]          # (1, 3H)

    def step(i, h):
        gi = gi_ref[i]                                   # (B, 3H), lane-aligned gate slabs
        gh = jnp.dot(h, whh, precision=MATMUL_PRECISION,
                     preferred_element_type=jnp.float32) + bhh
        # PyTorch gate order [r | z | n]; n uses r * (W_hn h + b_hn)
        r = jax.nn.sigmoid(gi[:, :H] + gh[:, :H])
        z = jax.nn.sigmoid(gi[:, H:2 * H] + gh[:, H:2 * H])
        n = jnp.tanh(gi[:, 2 * H:] + r * gh[:, 2 * H:])
        h_new = (1.0 - z) * n + z * h
        hids_ref[i] = h_new.astype(hids_ref.dtype)       # VMEM store; HBM writeback once/chunk
        return h_new

    # Unrolled so the LLO scheduler can overlap the per-step matmul with gate math.
    h_scr[...] = jax.lax.fori_loop(0, chunk, step, h_scr[...], unroll=True)


def gru_pallas(gi, w_hh_t, b_hh, h0, *, chunk):
    """gi: (Tp, Bp, 3H) time-major precomputed input gates. Returns hids (Tp, Bp, H)."""
    Tp, Bp, G = gi.shape
    H = h0.shape[-1]
    assert G == 3 * H and Tp % chunk == 0
    num_chunks = Tp // chunk
    kernel = functools.partial(gru_chunk_kernel, hidden_size=H, chunk=chunk)
    # NOTE: W_hh/b_hh/h0 use constant index maps -> DMA'd once and held in VMEM. At very
    # large H one would additionally single-buffer them (memory_space=pl.ANY + one
    # sync_copy) to avoid the default double buffers.
    return pl.pallas_call(
        kernel,
        out_shape=jax.ShapeDtypeStruct((Tp, Bp, H), jnp.float32),
        grid_spec=pltpu.PrefetchScalarGridSpec(
            num_scalar_prefetch=0,
            grid=(num_chunks,),
            in_specs=[
                pl.BlockSpec((chunk, Bp, 3 * H), lambda c: (c, 0, 0)),  # gi chunk
                pl.BlockSpec((H, 3 * H), lambda c: (0, 0)),             # W_hh^T
                pl.BlockSpec((1, 3 * H), lambda c: (0, 0)),             # b_hh
                pl.BlockSpec((Bp, H), lambda c: (0, 0)),                # h0
            ],
            out_specs=pl.BlockSpec((chunk, Bp, H), lambda c: (c, 0, 0)),
            scratch_shapes=[pltpu.VMEM((Bp, H), jnp.float32)],          # carried hidden
        ),
        compiler_params=pltpu.CompilerParams(
            dimension_semantics=("arbitrary",),   # sequential recurrence
        ),
    )(gi, w_hh_t, b_hh, h0)


# ----------------------------------------------------------------------------
# Decoder wrapper (glue in plain JAX: embedding gather, context concat, padding)
# ----------------------------------------------------------------------------
def decoder_forward(params, init_hidden, context, inputs, *, time_chunk=8):
    """init_hidden: (B, H), context: (B, C) or None, inputs: (B, T) int32."""
    B, T = inputs.shape
    H = init_hidden.shape[-1]
    V = params["w_out_t"].shape[-1]

    emb = jnp.take(params["embedding"], inputs, axis=0)              # (B, T, E)
    if context is not None:
        rep_ctx = jnp.broadcast_to(context[:, None, :], (B, T, context.shape[-1]))
        x = jnp.concatenate([emb, rep_ctx], axis=2)                  # (B, T, I)
    else:
        x = emb
    # F.dropout(..., training=False) -> identity in eval mode
    # TODO(synk): training-mode dropout (stochastic masking via pltpu.prng_*) not implemented.

    # Pad batch to a multiple of 8 sublanes and time to a multiple of the chunk size.
    Bp = _round_up(B, 8)
    Tc = min(time_chunk, T)
    Tp = _round_up(T, Tc)
    x = jnp.pad(x, ((0, Bp - B), (0, Tp - T), (0, 0)))
    h0 = jnp.pad(init_hidden, ((0, Bp - B), (0, 0)))

    # Hoisted input projection: gi = x @ W_ih^T + b_ih for ALL time steps at once.
    x_tbi = jnp.transpose(x, (1, 0, 2))                              # time-major (Tp, Bp, I)
    I = x_tbi.shape[-1]
    gi = linear_pallas(x_tbi.reshape(Tp * Bp, I),
                       params["w_ih_t"], params["b_ih"]).reshape(Tp, Bp, 3 * H)

    hids_tbh = gru_pallas(gi, params["w_hh_t"], params["b_hh"], h0, chunk=Tc)  # (Tp, Bp, H)

    # Transpose the (small) hidden slab in XLA — far cheaper than transposing logits —
    # then drop padding before the vocab projection so we don't project padded rows.
    hids = jnp.transpose(hids_tbh, (1, 0, 2))[:B, :T]                # (B, T, H)

    decoded = linear_pallas(hids.reshape(B * T, H), params["w_out_t"], params["b_out"])
    return decoded.reshape(B, T, V)


# ----------------------------------------------------------------------------
# Pure-JAX reference (for correctness check)
# ----------------------------------------------------------------------------
def decoder_reference(params, init_hidden, context, inputs):
    B, T = inputs.shape
    emb = jnp.take(params["embedding"], inputs, axis=0)
    x = jnp.concatenate(
        [emb, jnp.broadcast_to(context[:, None, :], (B, T, context.shape[-1]))], axis=2)
    H = init_hidden.shape[-1]

    def step(h, x_t):
        gi = x_t @ params["w_ih_t"] + params["b_ih"][0]
        gh = h @ params["w_hh_t"] + params["b_hh"][0]
        r = jax.nn.sigmoid(gi[:, :H] + gh[:, :H])
        z = jax.nn.sigmoid(gi[:, H:2 * H] + gh[:, H:2 * H])
        n = jnp.tanh(gi[:, 2 * H:] + r * gh[:, 2 * H:])
        h_new = (1.0 - z) * n + z * h
        return h_new, h_new

    _, hids = jax.lax.scan(step, init_hidden, jnp.transpose(x, (1, 0, 2)))
    hids = jnp.transpose(hids, (1, 0, 2))
    return hids @ params["w_out_t"] + params["b_out"][0]


# ----------------------------------------------------------------------------
# Deterministic parameter construction (mirrors Decoder.__init__ / init_weights)
# ----------------------------------------------------------------------------
def make_params(key, vocab_size, emb_dim, input_size, hidden_size):
    k_emb, k_ih, k_hh, k_bih, k_bhh, k_out = jax.random.split(key, 6)
    ortho = jax.nn.initializers.orthogonal()
    initrange = 0.1
    bstd = 1.0 / jnp.sqrt(hidden_size)
    return {
        "embedding": jax.random.normal(k_emb, (vocab_size, emb_dim), jnp.float32) * 0.1,
        # nn.GRU weights (orthogonal per init_weights), stored pre-transposed
        "w_ih_t": ortho(k_ih, (3 * hidden_size, input_size), jnp.float32).T,   # (I, 3H)
        "w_hh_t": ortho(k_hh, (3 * hidden_size, hidden_size), jnp.float32).T,  # (H, 3H)
        "b_ih": jax.random.uniform(k_bih, (1, 3 * hidden_size), jnp.float32, -bstd, bstd),
        "b_hh": jax.random.uniform(k_bhh, (1, 3 * hidden_size), jnp.float32, -bstd, bstd),
        # nn.Linear(hidden, vocab): weight uniform(-0.1, 0.1), bias zero
        "w_out_t": jax.random.uniform(
            k_out, (vocab_size, hidden_size), jnp.float32, -initrange, initrange).T,  # (H, V)
        "b_out": jnp.zeros((1, vocab_size), jnp.float32),
    }


if __name__ == "__main__":
    # Small, lane/sublane-friendly shapes consistent with the module's forward
    B, T = 2, 8
    emb_dim, ctx_dim = 64, 64
    input_size = emb_dim + ctx_dim          # 128 (embedding + repeated context)
    hidden_size = 128                       # multiple of 128 -> lane-aligned gate slabs
    vocab_size = 256

    key = jax.random.PRNGKey(0)
    kp, kh, kc, ki = jax.random.split(key, 4)

    params = make_params(kp, vocab_size, emb_dim, input_size, hidden_size)
    init_hidden = jax.random.normal(kh, (B, hidden_size), jnp.float32) * 0.1
    context = jax.random.normal(kc, (B, ctx_dim), jnp.float32) * 0.1
    inputs = jax.random.randint(ki, (B, T), 0, vocab_size, jnp.int32)

    out = decoder_forward(params, init_hidden, context, inputs)
    out = jax.block_until_ready(out)
    assert out.shape == (B, T, vocab_size)

    ref = jax.block_until_ready(decoder_reference(params, init_hidden, context, inputs))
    assert jnp.allclose(out, ref, atol=2e-3, rtol=2e-3), "mismatch vs JAX reference"

    print("KERNEL_OK")
</pallas_src>

<mosaic_0001>
module attributes {stable_mosaic.version = 11 : i64} {
  func.func @linear_kernel(%arg0: i32, %arg1: i32, %arg2: memref<64x128xf32, #tpu.memory_space<vmem>>, %arg3: memref<128x384xf32, #tpu.memory_space<vmem>>, %arg4: memref<1x384xf32, #tpu.memory_space<vmem>>, %arg5: memref<64x384xf32, #tpu.memory_space<vmem>>) attributes {dimension_semantics = [#tpu.dimension_semantics<parallel>, #tpu.dimension_semantics<parallel>], iteration_bounds = array<i64: 1, 1>, scalar_prefetch = 0 : i64, scratch_operands = 0 : i64, tpu.core_type = #tpu.core_type<tc>, window_params = [{transform_indices = @transform_0, window_bounds = array<i64: 64, 128>}, {transform_indices = @transform_1, window_bounds = array<i64: 128, 384>}, {transform_indices = @transform_2, window_bounds = array<i64: 1, 384>}, {transform_indices = @transform_3, window_bounds = array<i64: 64, 384>}]} {
    %c0 = arith.constant 0 : index
    %c0_0 = arith.constant 0 : index
    %0 = vector.load %arg2[%c0, %c0_0] : memref<64x128xf32, #tpu.memory_space<vmem>>, vector<64x128xf32>
    %c0_1 = arith.constant 0 : index
    %c0_2 = arith.constant 0 : index
    %1 = vector.load %arg3[%c0_1, %c0_2] : memref<128x384xf32, #tpu.memory_space<vmem>>, vector<128x384xf32>
    %cst = arith.constant dense<0.000000e+00> : vector<64x384xf32>
    %2 = tpu.matmul %0, %1, %cst {dimension_numbers = #tpu.dot_dimension_numbers<[1], [0], [0], [1], [0, 0, 1, 1], [], []>} : vector<64x128xf32>, vector<128x384xf32>, vector<64x384xf32> -> vector<64x384xf32>
    %c0_3 = arith.constant 0 : index
    %c0_4 = arith.constant 0 : index
    %3 = vector.load %arg4[%c0_3, %c0_4] : memref<1x384xf32, #tpu.memory_space<vmem>>, vector<1x384xf32>
    %4 = vector.broadcast %3 : vector<1x384xf32> to vector<64x384xf32>
    %5 = arith.addf %2, %4 : vector<64x384xf32>
    %c0_5 = arith.constant 0 : index
    %c0_6 = arith.constant 0 : index
    %6 = vector.load %arg5[%c0_5, %c0_6] : memref<64x384xf32, #tpu.memory_space<vmem>>, vector<64x384xf32>
    tpu.vector_store %arg5[%c0_5, %c0_6], %5 {strides = array<i32>} : memref<64x384xf32, #tpu.memory_space<vmem>>, vector<64x384xf32>,
    return
  }
  func.func @transform_0(%arg0: i32, %arg1: i32) -> (i32, i32) {
    %c0_i32 = arith.constant 0 : i32
    %c0_i32_0 = arith.constant 0 : i32
    return %arg0, %c0_i32 : i32, i32
  }
  func.func @transform_1(%arg0: i32, %arg1: i32) -> (i32, i32) {
    %c0_i32 = arith.constant 0 : i32
    %c0_i32_0 = arith.constant 0 : i32
    return %c0_i32, %arg1 : i32, i32
  }
  func.func @transform_2(%arg0: i32, %arg1: i32) -> (i32, i32) {
    %c0_i32 = arith.constant 0 : i32
    %c0_i32_0 = arith.constant 0 : i32
    return %c0_i32, %arg1 : i32, i32
  }
  func.func @transform_3(%arg0: i32, %arg1: i32) -> (i32, i32) {
    %c0_i32 = arith.constant 0 : i32
    return %arg0, %arg1 : i32, i32
  }
}

</mosaic_0001>

<llo_original>
// kernel: tpu_custom_call.1
$region0: #{tpu_custom_call.1}
  #allocation0 [shape = 'u32[]', space=smem, size = 0x4, offset = 0x4, fixed_abs, tag = 'smem constant byte address 0x4 - core index']
  #allocation1 [shape = 'u32[72,128]{1,0:T(1,128)}', space=vmem, size = 0x9000, scoped, tag = 'internal scratch']
  %s0 = inlined_call_operand.hbm [shape: f32[64,128], index: 0, kind: input, shape index: {}]
  %s1 = inlined_call_operand.hbm [shape: f32[128,384], index: 1, kind: input, shape index: {}]
  %s2 = inlined_call_operand.hbm [shape: f32[1,384], index: 2, kind: input, shape index: {}]
  %s3 = inlined_call_operand.hbm [shape: f32[64,384], index: 3, kind: output, shape index: {}]
  %s4 = sld [smem:[#allocation0]]
  $region34: #{tpu_custom_call.1} parent=0
    _
  %s6 = ssub.s32 1, %s4
  %s7 = scalar_select 0, %s6, %s4
  $region1: #{tpu_custom_call.1} parent=0
    #allocation2 [shape = 'u8[32768]{0}', space=vmem, size = 0x8000, scoped, tag = 'input window, operand 0, single buffered']
    #allocation3 [shape = 's32[1]{0}', space=sflag, size = 0x4, scoped, tag = 'scoped memory for tpu_custom_call.1']
    #allocation4 [shape = 's32[1]{0}', space=sflag, size = 0x4, scoped, tag = 'scoped memory for tpu_custom_call.1']
    #allocation5 [shape = 'u8[196608]{0}', space=vmem, size = 0x30000, scoped, tag = 'input window, operand 1, single buffered']
    #allocation6 [shape = 's32[1]{0}', space=sflag, size = 0x4, scoped, tag = 'scoped memory for tpu_custom_call.1']
    #allocation7 [shape = 'u8[1536]{0}', space=vmem, size = 0x800, scoped, tag = 'input window, operand 2, single buffered']
    #allocation8 [shape = 'u8[98304]{0}', space=vmem, size = 0x18000, scoped, tag = 'output window, operand 0, single buffered']
    %8 = vsyncpa [#allocation3], 0
    %9 = vsyncpa [#allocation6], 0
    %10 = vsyncpa [#allocation4], 0
    // Predicated region
    $region2: #{tpu_custom_call.1} parent=1 // pred_check
      _
    $region3: #{tpu_custom_call.1} parent=1 // pred_check_branch
      %12 = sbr.rel (0) target = $region5
    $region4: #{tpu_custom_call.1} parent=1 // pred_region
      %14 = vsyncadd [#allocation3], 0
      %s15 = sshll.u32 %s0, 4
      %s16 = int_to_ptr.hbm [resolvable:$true] %s15
      %s17 = sshll.u32 [#allocation2], 4
      %s18 = int_to_ptr.vmem [resolvable:$true] %s17
      %23 = dma.hbm_to_vmem [thread:$0]  %s16, 1024, %s18, [#allocation3], 128, 128, 8
    $region5: #{tpu_custom_call.1} parent=1 // pred_fallthru
      _
    // Predicated region
    $region6: #{tpu_custom_call.1} parent=1 // pred_check
      _
    $region7: #{tpu_custom_call.1} parent=1 // pred_check_branch
      %25 = sbr.rel (0) target = $region9
    $region8: #{tpu_custom_call.1} parent=1 // pred_region
      %27 = vsyncadd [#allocation6], 0
      %s28 = sshll.u32 %s1, 4
      %s29 = int_to_ptr.hbm [resolvable:$true] %s28
      %s30 = sshll.u32 [#allocation5], 4
      %s31 = int_to_ptr.vmem [resolvable:$true] %s30
      %36 = dma.hbm_to_vmem [thread:$0]  %s29, 6144, %s31, [#allocation6], 384, 384, 24
    $region9: #{tpu_custom_call.1} parent=1 // pred_fallthru
      _
    // Predicated region
    $region10: #{tpu_custom_call.1} parent=1 // pred_check
      _
    $region11: #{tpu_custom_call.1} parent=1 // pred_check_branch
      %38 = sbr.rel (0) target = $region13
    $region12: #{tpu_custom_call.1} parent=1 // pred_region
      %40 = vsyncadd [#allocation6], 0
      %s42 = sshll.u32 %s2, 4
      %s43 = int_to_ptr.hbm [resolvable:$true] %s42
      %s44 = sshll.u32 [#allocation7], 4
      %s45 = int_to_ptr.vmem [resolvable:$true] %s44
      %47 = dma.hbm_to_vmem [thread:$0]  %s43, 48, %s45, [#allocation6]
    $region13: #{tpu_custom_call.1} parent=1 // pred_fallthru
      _
    // Predicated region
    $region14: #{tpu_custom_call.1} parent=1 // pred_check
      _
    $region15: #{tpu_custom_call.1} parent=1 // pred_check_branch
      %49 = sbr.rel (0) target = $region17
    $region16: #{tpu_custom_call.1} parent=1 // pred_region
      %51 = dma.done [#allocation3], 1024
    $region17: #{tpu_custom_call.1} parent=1 // pred_fallthru
      _
    // Predicated region
    $region18: #{tpu_custom_call.1} parent=1 // pred_check
      _
    $region19: #{tpu_custom_call.1} parent=1 // pred_check_branch
      %53 = sbr.rel (0) target = $region21
    $region20: #{tpu_custom_call.1} parent=1 // pred_region
      %55 = dma.done [#allocation6], 6144
    $region21: #{tpu_custom_call.1} parent=1 // pred_fallthru
      _
    // Predicated region
    $region22: #{tpu_custom_call.1} parent=1 // pred_check
      _
    $region23: #{tpu_custom_call.1} parent=1 // pred_check_branch
      %57 = sbr.rel (0) target = $region25
    $region24: #{tpu_custom_call.1} parent=1 // pred_region
      %59 = dma.done [#allocation6], 48
    $region25: #{tpu_custom_call.1} parent=1 // pred_fallthru
      _
    %v60 = vld [vmem:[#allocation2] sm:$0xff]
    %v61 = vld [vmem:[#allocation2 + $0x8] sm:$0xff]
    %v62 = vld [vmem:[#allocation2 + $0x10] sm:$0xff]
    %v63 = vld [vmem:[#allocation2 + $0x18] sm:$0xff]
    %v64 = vld [vmem:[#allocation2 + $0x20] sm:$0xff]
    %v65 = vld [vmem:[#allocation2 + $0x28] sm:$0xff]
    %v66 = vld [vmem:[#allocation2 + $0x30] sm:$0xff]
    %v67 = vld [vmem:[#allocation2 + $0x38] sm:$0xff]
    %v68 = vld [vmem:[#allocation5] sm:$0xff]
    %v69 = vld [vmem:[#allocation5 + $0x8] sm:$0xff]
    %v70 = vld [vmem:[#allocation5 + $0x10] sm:$0xff]
    %v71 = vld [vmem:[#allocation5 + $0x18] sm:$0xff]
    %v72 = vld [vmem:[#allocation5 + $0x20] sm:$0xff]
    %v73 = vld [vmem:[#allocation5 + $0x28] sm:$0xff]
    %v74 = vld [vmem:[#allocation5 + $0x30] sm:$0xff]
    %v75 = vld [vmem:[#allocation5 + $0x38] sm:$0xff]
    %v76 = vld [vmem:[#allocation5 + $0x40] sm:$0xff]
    %v77 = vld [vmem:[#allocation5 + $0x48] sm:$0xff]
    %v78 = vld [vmem:[#allocation5 + $0x50] sm:$0xff]
    %v79 = vld [vmem:[#allocation5 + $0x58] sm:$0xff]
    %v80 = vld [vmem:[#allocation5 + $0x60] sm:$0xff]
    %v81 = vld [vmem:[#allocation5 + $0x68] sm:$0xff]
    %v82 = vld [vmem:[#allocation5 + $0x70] sm:$0xff]
    %v83 = vld [vmem:[#allocation5 + $0x78] sm:$0xff]
    %v84 = vld [vmem:[#allocation5 + $0x80] sm:$0xff]
    %v85 = vld [vmem:[#allocation5 + $0x88] sm:$0xff]
    %v86 = vld [vmem:[#allocation5 + $0x90] sm:$0xff]
    %v87 = vld [vmem:[#allocation5 + $0x98] sm:$0xff]
    %v88 = vld [vmem:[#allocation5 + $0xa0] sm:$0xff]
    %v89 = vld [vmem:[#allocation5 + $0xa8] sm:$0xff]
    %v90 = vld [vmem:[#allocation5 + $0xb0] sm:$0xff]
    %v91 = vld [vmem:[#allocation5 + $0xb8] sm:$0xff]
    %v92 = vld [vmem:[#allocation5 + $0xc0] sm:$0xff]
    %v93 = vld [vmem:[#allocation5 + $0xc8] sm:$0xff]
    %v94 = vld [vmem:[#allocation5 + $0xd0] sm:$0xff]
    %v95 = vld [vmem:[#allocation5 + $0xd8] sm:$0xff]
    %v96 = vld [vmem:[#allocation5 + $0xe0] sm:$0xff]
    %v97 = vld [vmem:[#allocation5 + $0xe8] sm:$0xff]
    %v98 = vld [vmem:[#allocation5 + $0xf0] sm:$0xff]
    %v99 = vld [vmem:[#allocation5 + $0xf8] sm:$0xff]
    %v100 = vld [vmem:[#allocation5 + $0x100] sm:$0xff]
    %v101 = vld [vmem:[#allocation5 + $0x108] sm:$0xff]
    %v102 = vld [vmem:[#allocation5 + $0x110] sm:$0xff]
    %v103 = vld [vmem:[#allocation5 + $0x118] sm:$0xff]
    %v104 = vld [vmem:[#allocation5 + $0x120] sm:$0xff]
    %v105 = vld [vmem:[#allocation5 + $0x128] sm:$0xff]
    %v106 = vld [vmem:[#allocation5 + $0x130] sm:$0xff]
    %v107 = vld [vmem:[#allocation5 + $0x138] sm:$0xff]
    %v108 = vld [vmem:[#allocation5 + $0x140] sm:$0xff]
    %v109 = vld [vmem:[#allocation5 + $0x148] sm:$0xff]
    %v110 = vld [vmem:[#allocation5 + $0x150] sm:$0xff]
    %v111 = vld [vmem:[#allocation5 + $0x158] sm:$0xff]
    %v112 = vld [vmem:[#allocation5 + $0x160] sm:$0xff]
    %v113 = vld [vmem:[#allocation5 + $0x168] sm:$0xff]
    %v114 = vld [vmem:[#allocation5 + $0x170] sm:$0xff]
    %v115 = vld [vmem:[#allocation5 + $0x178] sm:$0xff]
    %v116 = vld [vmem:[#allocation7] sm:$0x7]
    %v118 = vperm.slane %v116, 0
    %v119 = vperm.slane %v116, 1
    %v120 = vperm.slane %v116, 2
    %124 = vmatpush.msra.mxu0 %v113
    %125 = vmatpush.msra.mxu0 %v110
    %126 = vmatpush.msra.mxu0 %v107
    %127 = vmatpush.msra.mxu0 %v104
    %128 = vmatpush.msra.mxu0 %v101
    %129 = vmatpush.msra.mxu0 %v98
    %130 = vmatpush.msra.mxu0 %v95
    %131 = vmatpush.msra.mxu0 %v92
    %132 = vmatpush.msra.mxu0 %v89
    %133 = vmatpush.msra.mxu0 %v86
    %134 = vmatpush.msra.mxu0 %v83
    %135 = vmatpush.msra.mxu0 %v80
    %136 = vmatpush.msra.mxu0 %v77
    %137 = vmatpush.msra.mxu0 %v74
    %138 = vmatpush.msra.mxu0 %v71
    %139 = vmatpush.msra.mxu0 %v68
    %140 = vmatmul.f32.gmra.mxu0 %v60
    %v141 = vpop.f32.mrf.mxu0
    %v142 = vadd.f32 %v118, %v141
    %143 = vmatmul.f32.gmra.mxu0 %v61
    %v144 = vpop.f32.mrf.mxu0
    %v145 = vadd.f32 %v118, %v144
    %146 = vmatmul.f32.gmra.mxu0 %v62
    %v147 = vpop.f32.mrf.mxu0
    %v148 = vadd.f32 %v118, %v147
    %149 = vmatmul.f32.gmra.mxu0 %v63
    %v150 = vpop.f32.mrf.mxu0
    %v151 = vadd.f32 %v118, %v150
    %152 = vmatmul.f32.gmra.mxu0 %v64
    %v153 = vpop.f32.mrf.mxu0
    %v154 = vadd.f32 %v118, %v153
    %155 = vmatmul.f32.gmra.mxu0 %v65
    %v156 = vpop.f32.mrf.mxu0
    %v157 = vadd.f32 %v118, %v156
    %158 = vmatmul.f32.gmra.mxu0 %v66
    %v159 = vpop.f32.mrf.mxu0
    %v160 = vadd.f32 %v118, %v159
    %161 = vmatmul.f32.gmra.mxu0 %v67
    %v162 = vpop.f32.mrf.mxu0
    %v163 = vadd.f32 %v118, %v162
    %164 = vdwg.mxu0
    %165 = vmatpush.msra.mxu0 %v114
    %166 = vmatpush.msra.mxu0 %v111
    %167 = vmatpush.msra.mxu0 %v108
    %168 = vmatpush.msra.mxu0 %v105
    %169 = vmatpush.msra.mxu0 %v102
    %170 = vmatpush.msra.mxu0 %v99
    %171 = vmatpush.msra.mxu0 %v96
    %172 = vmatpush.msra.mxu0 %v93
    %173 = vmatpush.msra.mxu0 %v90
    %174 = vmatpush.msra.mxu0 %v87
    %175 = vmatpush.msra.mxu0 %v84
    %176 = vmatpush.msra.mxu0 %v81
    %177 = vmatpush.msra.mxu0 %v78
    %178 = vmatpush.msra.mxu0 %v75
    %179 = vmatpush.msra.mxu0 %v72
    %180 = vmatpush.msra.mxu0 %v69
    %181 = vmatmul.f32.gmra.mxu0 %v60
    %v182 = vpop.f32.mrf.mxu0
    %v183 = vadd.f32 %v119, %v182
    %184 = vmatmul.f32.gmra.mxu0 %v61
    %v185 = vpop.f32.mrf.mxu0
    %v186 = vadd.f32 %v119, %v185
    %187 = vmatmul.f32.gmra.mxu0 %v62
    %v188 = vpop.f32.mrf.mxu0
    %v189 = vadd.f32 %v119, %v188
    %190 = vmatmul.f32.gmra.mxu0 %v63
    %v191 = vpop.f32.mrf.mxu0
    %v192 = vadd.f32 %v119, %v191
    %193 = vmatmul.f32.gmra.mxu0 %v64
    %v194 = vpop.f32.mrf.mxu0
    %v195 = vadd.f32 %v119, %v194
    %196 = vmatmul.f32.gmra.mxu0 %v65
    %v197 = vpop.f32.mrf.mxu0
    %v198 = vadd.f32 %v119, %v197
    %199 = vmatmul.f32.gmra.mxu0 %v66
    %v200 = vpop.f32.mrf.mxu0
    %v201 = vadd.f32 %v119, %v200
    %202 = vmatmul.f32.gmra.mxu0 %v67
    %v203 = vpop.f32.mrf.mxu0
    %v204 = vadd.f32 %v119, %v203
    %205 = vdwg.mxu0
    %206 = vmatpush.msra.mxu0 %v115
    %207 = vmatpush.msra.mxu0 %v112
    %208 = vmatpush.msra.mxu0 %v109
    %209 = vmatpush.msra.mxu0 %v106
    %210 = vmatpush.msra.mxu0 %v103
    %211 = vmatpush.msra.mxu0 %v100
    %212 = vmatpush.msra.mxu0 %v97
    %213 = vmatpush.msra.mxu0 %v94
    %214 = vmatpush.msra.mxu0 %v91
    %215 = vmatpush.msra.mxu0 %v88
    %216 = vmatpush.msra.mxu0 %v85
    %217 = vmatpush.msra.mxu0 %v82
    %218 = vmatpush.msra.mxu0 %v79
    %219 = vmatpush.msra.mxu0 %v76
    %220 = vmatpush.msra.mxu0 %v73
    %221 = vmatpush.msra.mxu0 %v70
    %222 = vmatmul.f32.gmra.mxu0 %v60
    %v223 = vpop.f32.mrf.mxu0
    %v224 = vadd.f32 %v120, %v223
    %225 = vmatmul.f32.gmra.mxu0 %v61
    %v226 = vpop.f32.mrf.mxu0
    %v227 = vadd.f32 %v120, %v226
    %228 = vmatmul.f32.gmra.mxu0 %v62
    %v229 = vpop.f32.mrf.mxu0
    %v230 = vadd.f32 %v120, %v229
    %231 = vmatmul.f32.gmra.mxu0 %v63
    %v232 = vpop.f32.mrf.mxu0
    %v233 = vadd.f32 %v120, %v232
    %234 = vmatmul.f32.gmra.mxu0 %v64
    %v235 = vpop.f32.mrf.mxu0
    %v236 = vadd.f32 %v120, %v235
    %237 = vmatmul.f32.gmra.mxu0 %v65
    %v238 = vpop.f32.mrf.mxu0
    %v239 = vadd.f32 %v120, %v238
    %240 = vmatmul.f32.gmra.mxu0 %v66
    %v241 = vpop.f32.mrf.mxu0
    %v242 = vadd.f32 %v120, %v241
    %243 = vmatmul.f32.gmra.mxu0 %v67
    %v244 = vpop.f32.mrf.mxu0
    %v245 = vadd.f32 %v120, %v244
    %246 = vdwg.mxu0
    %247 = vst [vmem:[#allocation8] sm:$0xff] %v142
    %248 = vst [vmem:[#allocation8 + $0x8] sm:$0xff] %v183
    %249 = vst [vmem:[#allocation8 + $0x10] sm:$0xff] %v224
    %250 = vst [vmem:[#allocation8 + $0x18] sm:$0xff] %v145
    %251 = vst [vmem:[#allocation8 + $0x20] sm:$0xff] %v186
    %252 = vst [vmem:[#allocation8 + $0x28] sm:$0xff] %v227
    %253 = vst [vmem:[#allocation8 + $0x30] sm:$0xff] %v148
    %254 = vst [vmem:[#allocation8 + $0x38] sm:$0xff] %v189
    %255 = vst [vmem:[#allocation8 + $0x40] sm:$0xff] %v230
    %256 = vst [vmem:[#allocation8 + $0x48] sm:$0xff] %v151
    %257 = vst [vmem:[#allocation8 + $0x50] sm:$0xff] %v192
    %258 = vst [vmem:[#allocation8 + $0x58] sm:$0xff] %v233
    %259 = vst [vmem:[#allocation8 + $0x60] sm:$0xff] %v154
    %260 = vst [vmem:[#allocation8 + $0x68] sm:$0xff] %v195
    %261 = vst [vmem:[#allocation8 + $0x70] sm:$0xff] %v236
    %262 = vst [vmem:[#allocation8 + $0x78] sm:$0xff] %v157
    %263 = vst [vmem:[#allocation8 + $0x80] sm:$0xff] %v198
    %264 = vst [vmem:[#allocation8 + $0x88] sm:$0xff] %v239
    %265 = vst [vmem:[#allocation8 + $0x90] sm:$0xff] %v160
    %266 = vst [vmem:[#allocation8 + $0x98] sm:$0xff] %v201
    %267 = vst [vmem:[#allocation8 + $0xa0] sm:$0xff] %v242
    %268 = vst [vmem:[#allocation8 + $0xa8] sm:$0xff] %v163
    %269 = vst [vmem:[#allocation8 + $0xb0] sm:$0xff] %v204
    %270 = vst [vmem:[#allocation8 + $0xb8] sm:$0xff] %v245
    // Predicated region
    $region26: #{tpu_custom_call.1} parent=1 // pred_check
      _
    $region27: #{tpu_custom_call.1} parent=1 // pred_check_branch
      %272 = sbr.rel (0) target = $region29
    $region28: #{tpu_custom_call.1} parent=1 // pred_region
      %274 = vsyncadd [#allocation4], 0
      %s275 = sshll.u32 [#allocation8], 4
      %s276 = int_to_ptr.vmem [resolvable:$true] %s275
      %s277 = sshll.u32 %s3, 4
      %s278 = int_to_ptr.hbm [resolvable:$true] %s277
      %283 = dma.vmem_to_hbm [thread:$0]  %s276, 3072, %s278, [#allocation4], 384, 384, 24
    $region29: #{tpu_custom_call.1} parent=1 // pred_fallthru
      _
    // Predicated region
    $region30: #{tpu_custom_call.1} parent=1 // pred_check
      _
    $region31: #{tpu_custom_call.1} parent=1 // pred_check_branch
      %285 = sbr.rel (0) target = $region33
    $region32: #{tpu_custom_call.1} parent=1 // pred_region
      %287 = dma.done [#allocation4], 3072
    $region33: #{tpu_custom_call.1} parent=1 // pred_fallthru
      _
    %288 = vsyncpa [#allocation3], 1
    %289 = vsyncpa [#allocation6], 1
    %290 = vsyncpa [#allocation4], 1

</llo_original>
